<compile_context>
chip_gen: v5e
topology: v5e:2x2
jax: 0.10.0
libtpu: 0.0.40
codegen_flags: <defaults>
</compile_context>

<pallas_src>
import functools

import jax
import jax.numpy as jnp
from jax.experimental import pallas as pl
from jax.experimental.pallas import tpu as pltpu


# -----------------------------------------------------------------------------
# Fused Pallas kernel: whole DConvolution for one batch element
# -----------------------------------------------------------------------------
def dconv_kernel(x_ref, w03_ref, b_ref, w4_ref, alpha_ref, out_ref, *, width):
    # x_ref    : (1, C, HW)        input activation, channels-first, HW on lanes
    # w03_ref  : (4, Co, 5*C)      packed tap weights of blocks 0..3
    # b_ref    : (5, Co, 1)        conv2 biases of the 5 blocks
    # w4_ref   : (2*Co, 5*(5*C))   block-4 weights; rows [Co:2Co] hold the 1x1 shortcut
    # alpha_ref: (5,) in SMEM      per-block PReLU slopes
    # out_ref  : (1, Co, HW)
    hw = x_ref.shape[2]
    co = out_ref.shape[1]

    # Boundary masks for the shifted taps (f32 so they lower to plain VPU multiplies).
    p = jax.lax.broadcasted_iota(jnp.int32, (1, hw), 1)
    col = p % width
    m_hm1 = (p >= width).astype(jnp.float32)        # x(h-1, w) valid
    m_hp1 = (p < hw - width).astype(jnp.float32)    # x(h+1, w) valid
    m_wm1 = (col > 0).astype(jnp.float32)           # x(h, w-1) valid
    m_wp1 = (col < width - 1).astype(jnp.float32)   # x(h, w+1) valid

    def taps(x):
        # x: (Ci, HW) -> (5*Ci, HW); tap order [x(h-1,w), x, x(h+1,w), x(h,w-1), x(h,w+1)]
        t_hm1 = pltpu.roll(x, width, 1) * m_hm1
        t_hp1 = pltpu.roll(x, hw - width, 1) * m_hp1
        t_wm1 = pltpu.roll(x, 1, 1) * m_wm1
        t_wp1 = pltpu.roll(x, hw - 1, 1) * m_wp1
        return jnp.concatenate([t_hm1, x, t_hp1, t_wm1, t_wp1], axis=0)

    def prelu(v, a):
        return jnp.where(v >= 0.0, v, a * v)

    def block(xin, i):
        # conv1 + conv2 + bias as one matmul; identity shortcut added after PReLU.
        acc = jnp.dot(w03_ref[i], taps(xin), preferred_element_type=jnp.float32)
        acc = acc + b_ref[i]                         # (Co, 1) lane-broadcast bias
        return prelu(acc, alpha_ref[i]) + xin

    x = x_ref[0]
    x0 = block(x, 0)
    x1 = block(x0, 1)
    x2 = block(x1, 2)
    x3 = block(x2, 3)

    # Block 4: channel concat input; its 1x1-conv shortcut occupies rows [co:2co] of w4
    # (non-zero only on the center-tap columns), so one matmul yields conv AND shortcut.
    xcat = jnp.concatenate([x, x0, x1, x2, x3], axis=0)          # (5*C, HW)
    full = jnp.dot(w4_ref[...], taps(xcat), preferred_element_type=jnp.float32)
    conv4 = full[:co] + b_ref[4]
    short4 = full[co:]
    out_ref[0] = (prelu(conv4, alpha_ref[4]) + short4).astype(out_ref.dtype)


# -----------------------------------------------------------------------------
# Wrapper
# -----------------------------------------------------------------------------
def dconvolution(x_nchw, params):
    """x_nchw: (N, C, H, W) float32 -> (N, C, H, W) float32."""
    n, c, h, w = x_nchw.shape
    hw = h * w
    co = params["w03"].shape[1]
    x_flat = x_nchw.reshape(n, c, hw)

    out = pl.pallas_call(
        functools.partial(dconv_kernel, width=w),
        out_shape=jax.ShapeDtypeStruct((n, co, hw), jnp.float32),
        grid=(n,),
        in_specs=[
            pl.BlockSpec((1, c, hw), lambda b: (b, 0, 0)),
            pl.BlockSpec(params["w03"].shape, lambda b: (0, 0, 0)),
            pl.BlockSpec(params["b"].shape, lambda b: (0, 0, 0)),
            pl.BlockSpec(params["w4"].shape, lambda b: (0, 0)),
            pl.BlockSpec(memory_space=pltpu.MemorySpace.SMEM),
        ],
        out_specs=pl.BlockSpec((1, co, hw), lambda b: (b, 0, 0)),
        compiler_params=pltpu.CompilerParams(
            dimension_semantics=("parallel",),
        ),
    )(x_flat, params["w03"], params["b"], params["w4"], params["alpha"])
    return out.reshape(n, co, h, w)


# -----------------------------------------------------------------------------
# Parameter init (PyTorch parameterization) and packing into the kernel layout
# -----------------------------------------------------------------------------
def init_dconv_blocks(key, cha):
    """Raw per-block params mirroring the PyTorch module's shapes."""
    def init_block(k, in_cha, out_cha):
        k1, k2, k3, k4 = jax.random.split(k, 4)
        blk = dict(
            conv1_w=jax.random.normal(k1, (out_cha, in_cha, 3, 1), jnp.float32) * 0.1,
            conv2_w=jax.random.normal(k2, (out_cha, in_cha, 1, 3), jnp.float32) * 0.1,
            conv2_b=jax.random.normal(k3, (out_cha,), jnp.float32) * 0.1,
            sc_w=None,                                  # identity shortcut
            alpha=jnp.float32(0.25),                    # nn.PReLU() default init
        )
        if in_cha != out_cha:
            blk["sc_w"] = jax.random.normal(k4, (out_cha, in_cha, 1, 1), jnp.float32) * 0.1
        return blk

    keys = jax.random.split(key, 5)
    blocks = [init_block(keys[i], cha, cha) for i in range(4)]
    blocks.append(init_block(keys[4], cha * 5, cha))
    return blocks


def _pack_tap_weight(conv1_w, conv2_w):
    # -> (Co, 5*Ci), column blocks matching the in-kernel tap order
    # [x(h-1,w), x, x(h+1,w), x(h,w-1), x(h,w+1)]
    v0 = conv1_w[:, :, 0, 0]
    ctr = conv1_w[:, :, 1, 0] + conv2_w[:, :, 0, 1]
    v2 = conv1_w[:, :, 2, 0]
    h0 = conv2_w[:, :, 0, 0]
    h2 = conv2_w[:, :, 0, 2]
    return jnp.concatenate([v0, ctr, v2, h0, h2], axis=1)


def pack_params(blocks):
    w03 = jnp.stack(
        [_pack_tap_weight(b["conv1_w"], b["conv2_w"]) for b in blocks[:4]], axis=0
    )                                                             # (4, Co, 5*C)
    bias = jnp.stack([b["conv2_b"] for b in blocks], axis=0)[:, :, None]   # (5, Co, 1)
    alpha = jnp.stack([b["alpha"] for b in blocks], axis=0)                # (5,)

    b4 = blocks[4]
    co, ci4 = b4["conv1_w"].shape[0], b4["conv1_w"].shape[1]
    w4_conv = _pack_tap_weight(b4["conv1_w"], b4["conv2_w"])               # (Co, 5*Ci4)
    wsc = b4["sc_w"][:, :, 0, 0]                                           # (Co, Ci4)
    w4_sc = jnp.zeros((co, 5 * ci4), jnp.float32).at[:, ci4:2 * ci4].set(wsc)
    w4 = jnp.concatenate([w4_conv, w4_sc], axis=0)                         # (2*Co, 5*Ci4)
    return dict(w03=w03, b=bias, w4=w4, alpha=alpha)


# -----------------------------------------------------------------------------
# Pure-JAX reference (independent of the kernel's packing / roll logic)
# -----------------------------------------------------------------------------
_HI = jax.lax.Precision.HIGHEST


def _conv3x1_ref(x, w):
    h = x.shape[2]
    xp = jnp.pad(x, ((0, 0), (0, 0), (1, 1), (0, 0)))
    out = 0.0
    for kh in range(3):
        out = out + jnp.einsum("ncij,oc->noij", xp[:, :, kh:kh + h, :],
                               w[:, :, kh, 0], precision=_HI)
    return out


def _conv1x3_ref(x, w, b):
    wd = x.shape[3]
    xp = jnp.pad(x, ((0, 0), (0, 0), (0, 0), (1, 1)))
    out = 0.0
    for kw in range(3):
        out = out + jnp.einsum("ncij,oc->noij", xp[:, :, :, kw:kw + wd],
                               w[:, :, 0, kw], precision=_HI)
    return out + b[None, :, None, None]


def _asym_ref(x, blk):
    if blk["sc_w"] is None:
        shortcut = x
    else:
        shortcut = jnp.einsum("ncij,oc->noij", x, blk["sc_w"][:, :, 0, 0], precision=_HI)
    y = _conv1x3_ref(x, blk["conv2_w"], blk["conv2_b"]) + _conv3x1_ref(x, blk["conv1_w"])
    y = jnp.where(y >= 0, y, blk["alpha"] * y)
    return y + shortcut


def dconvolution_ref(x, blocks):
    x0 = _asym_ref(x, blocks[0])
    x1 = _asym_ref(x0, blocks[1])
    x2 = _asym_ref(x1, blocks[2])
    x3 = _asym_ref(x2, blocks[3])
    cat = jnp.concatenate([x, x0, x1, x2, x3], axis=1)
    return _asym_ref(cat, blocks[4])


# -----------------------------------------------------------------------------
if __name__ == "__main__":
    N, C, H, W = 2, 4, 16, 16   # in_cha == out_cha == 4 (required by the module's chaining)

    key = jax.random.PRNGKey(0)
    kx, kp = jax.random.split(key)
    x = jax.random.normal(kx, (N, C, H, W), jnp.float32)      # PyTorch NCHW layout

    blocks = init_dconv_blocks(kp, C)
    params = pack_params(blocks)

    out = jax.jit(dconvolution)(x, params)
    jax.block_until_ready(out)

    assert out.shape == (N, C, H, W)
    assert bool(jnp.all(jnp.isfinite(out)))

    ref = dconvolution_ref(x, blocks)
    max_err = float(jnp.max(jnp.abs(out - ref)))
    assert max_err < 5e-2, f"kernel/reference mismatch, max abs err = {max_err}"

    print("KERNEL_OK")
</pallas_src>

<mosaic_0001>
module attributes {stable_mosaic.version = 11 : i64} {
  func.func @dconv_kernel(%arg0: i32, %arg1: memref<1x4x256xf32, #tpu.memory_space<vmem>>, %arg2: memref<4x4x20xf32, #tpu.memory_space<vmem>>, %arg3: memref<5x4x1xf32, #tpu.memory_space<vmem>>, %arg4: memref<8x100xf32, #tpu.memory_space<vmem>>, %arg5: memref<5xf32, #tpu.memory_space<smem>>, %arg6: memref<1x4x256xf32, #tpu.memory_space<vmem>>) attributes {dimension_semantics = [#tpu.dimension_semantics<parallel>], iteration_bounds = array<i64: 2>, scalar_prefetch = 0 : i64, scratch_operands = 0 : i64, tpu.core_type = #tpu.core_type<tc>, window_params = [{transform_indices = @transform_0, window_bounds = array<i64: 1, 4, 256>}, {pipeline_mode = #tpu.pipeline_mode<synchronous>, transform_indices = @transform_1, window_bounds = array<i64: 4, 4, 20>}, {pipeline_mode = #tpu.pipeline_mode<synchronous>, transform_indices = @transform_2, window_bounds = array<i64: 5, 4, 1>}, {pipeline_mode = #tpu.pipeline_mode<synchronous>, transform_indices = @transform_3, window_bounds = array<i64: 8, 100>}, {transform_indices = @transform_4, window_bounds = array<i64: 5>}, {transform_indices = @transform_5, window_bounds = array<i64: 1, 4, 256>}]} {
    %0 = tpu.iota {dimensions = array<i32: 1>} : vector<1x256xi32>
    %c16_i32 = arith.constant 16 : i32
    %c0_i32 = arith.constant 0 : i32
    %1 = arith.cmpi eq, %c16_i32, %c0_i32 : i32
    %c1_i32 = arith.constant 1 : i32
    %2 = arith.select %1, %c1_i32, %c16_i32 : i32
    %3 = vector.broadcast %2 : i32 to vector<1x256xi32>
    %4 = arith.remsi %0, %3 : vector<1x256xi32>
    %c0_i32_0 = arith.constant 0 : i32
    %5 = vector.broadcast %c0_i32_0 : i32 to vector<1x256xi32>
    %6 = arith.cmpi ne, %4, %5 : vector<1x256xi32>
    %c0_i32_1 = arith.constant 0 : i32
    %7 = vector.broadcast %c0_i32_1 : i32 to vector<1x256xi32>
    %8 = arith.cmpi slt, %4, %7 : vector<1x256xi32>
    %c0_i32_2 = arith.constant 0 : i32
    %9 = arith.cmpi slt, %2, %c0_i32_2 : i32
    %10 = vector.broadcast %9 : i1 to vector<1x256xi1>
    %11 = vector.broadcast %10 : vector<1x256xi1> to vector<1x256xi1>
    %12 = arith.xori %8, %11 : vector<1x256xi1>
    %13 = arith.andi %12, %6 : vector<1x256xi1>
    %14 = vector.broadcast %2 : i32 to vector<1x256xi32>
    %15 = arith.addi %4, %14 : vector<1x256xi32>
    %16 = arith.select %13, %15, %4 : vector<1x256xi1>, vector<1x256xi32>
    %c16_i32_3 = arith.constant 16 : i32
    %17 = vector.broadcast %c16_i32_3 : i32 to vector<1x256xi32>
    %18 = arith.cmpi sge, %0, %17 : vector<1x256xi32>
    %19 = arith.extui %18 : vector<1x256xi1> to vector<1x256xi32>
    %20 = arith.sitofp %19 : vector<1x256xi32> to vector<1x256xf32>
    %c240_i32 = arith.constant 240 : i32
    %21 = vector.broadcast %c240_i32 : i32 to vector<1x256xi32>
    %22 = arith.cmpi slt, %0, %21 : vector<1x256xi32>
    %23 = arith.extui %22 : vector<1x256xi1> to vector<1x256xi32>
    %24 = arith.sitofp %23 : vector<1x256xi32> to vector<1x256xf32>
    %c0_i32_4 = arith.constant 0 : i32
    %25 = vector.broadcast %c0_i32_4 : i32 to vector<1x256xi32>
    %26 = arith.cmpi sgt, %16, %25 : vector<1x256xi32>
    %27 = arith.extui %26 : vector<1x256xi1> to vector<1x256xi32>
    %28 = arith.sitofp %27 : vector<1x256xi32> to vector<1x256xf32>
    %c15_i32 = arith.constant 15 : i32
    %29 = vector.broadcast %c15_i32 : i32 to vector<1x256xi32>
    %30 = arith.cmpi slt, %16, %29 : vector<1x256xi32>
    %31 = arith.extui %30 : vector<1x256xi1> to vector<1x256xi32>
    %32 = arith.sitofp %31 : vector<1x256xi32> to vector<1x256xf32>
    %c0 = arith.constant 0 : index
    %c0_5 = arith.constant 0 : index
    %c0_6 = arith.constant 0 : index
    %33 = vector.load %arg1[%c0, %c0_5, %c0_6] : memref<1x4x256xf32, #tpu.memory_space<vmem>>, vector<1x4x256xf32>
    %34 = vector.shape_cast %33 : vector<1x4x256xf32> to vector<4x256xf32>
    %c0_7 = arith.constant 0 : index
    %c0_8 = arith.constant 0 : index
    %c0_9 = arith.constant 0 : index
    %35 = vector.load %arg2[%c0_7, %c0_8, %c0_9] : memref<4x4x20xf32, #tpu.memory_space<vmem>>, vector<1x4x20xf32>
    %36 = vector.shape_cast %35 : vector<1x4x20xf32> to vector<4x20xf32>
    %c16_i32_10 = arith.constant 16 : i32
    %37 = tpu.dynamic_rotate %34 by %c16_i32_10 dim 1 : vector<4x256xf32>, i32 -> vector<4x256xf32>
    %38 = vector.broadcast %20 : vector<1x256xf32> to vector<4x256xf32>
    %39 = arith.mulf %37, %38 : vector<4x256xf32>
    %c240_i32_11 = arith.constant 240 : i32
    %40 = tpu.dynamic_rotate %34 by %c240_i32_11 dim 1 : vector<4x256xf32>, i32 -> vector<4x256xf32>
    %41 = vector.broadcast %24 : vector<1x256xf32> to vector<4x256xf32>
    %42 = arith.mulf %40, %41 : vector<4x256xf32>
    %c1_i32_12 = arith.constant 1 : i32
    %43 = tpu.dynamic_rotate %34 by %c1_i32_12 dim 1 : vector<4x256xf32>, i32 -> vector<4x256xf32>
    %44 = vector.broadcast %28 : vector<1x256xf32> to vector<4x256xf32>
    %45 = arith.mulf %43, %44 : vector<4x256xf32>
    %c255_i32 = arith.constant 255 : i32
    %46 = tpu.dynamic_rotate %34 by %c255_i32 dim 1 : vector<4x256xf32>, i32 -> vector<4x256xf32>
    %47 = vector.broadcast %32 : vector<1x256xf32> to vector<4x256xf32>
    %48 = arith.mulf %46, %47 : vector<4x256xf32>
    %49 = tpu.concatenate %39, %34, %42, %45, %48 in 0 : vector<4x256xf32>, vector<4x256xf32>, vector<4x256xf32>, vector<4x256xf32>, vector<4x256xf32> -> vector<20x256xf32>
    %cst = arith.constant dense<0.000000e+00> : vector<4x256xf32>
    %50 = tpu.matmul %36, %49, %cst {dimension_numbers = #tpu.dot_dimension_numbers<[1], [0], [0], [1], [0, 0, 1, 1], [], []>} : vector<4x20xf32>, vector<20x256xf32>, vector<4x256xf32> -> vector<4x256xf32>
    %c0_13 = arith.constant 0 : index
    %c0_14 = arith.constant 0 : index
    %c0_15 = arith.constant 0 : index
    %51 = vector.load %arg3[%c0_13, %c0_14, %c0_15] : memref<5x4x1xf32, #tpu.memory_space<vmem>>, vector<1x4x1xf32>
    %52 = vector.shape_cast %51 : vector<1x4x1xf32> to vector<4x1xf32>
    %53 = vector.broadcast %52 : vector<4x1xf32> to vector<4x256xf32>
    %54 = arith.addf %50, %53 : vector<4x256xf32>
    %c0_16 = arith.constant 0 : index
    %55 = memref.load %arg5[%c0_16] : memref<5xf32, #tpu.memory_space<smem>>
    %cst_17 = arith.constant 0.000000e+00 : f32
    %56 = vector.broadcast %cst_17 : f32 to vector<4x256xf32>
    %57 = arith.cmpf oge, %54, %56 : vector<4x256xf32>
    %58 = vector.broadcast %55 : f32 to vector<4x256xf32>
    %59 = arith.mulf %58, %54 : vector<4x256xf32>
    %60 = arith.select %57, %54, %59 : vector<4x256xi1>, vector<4x256xf32>
    %61 = arith.addf %60, %34 : vector<4x256xf32>
    %c1 = arith.constant 1 : index
    %c0_18 = arith.constant 0 : index
    %c0_19 = arith.constant 0 : index
    %62 = vector.load %arg2[%c1, %c0_18, %c0_19] : memref<4x4x20xf32, #tpu.memory_space<vmem>>, vector<1x4x20xf32>
    %63 = vector.shape_cast %62 : vector<1x4x20xf32> to vector<4x20xf32>
    %c16_i32_20 = arith.constant 16 : i32
    %64 = tpu.dynamic_rotate %61 by %c16_i32_20 dim 1 : vector<4x256xf32>, i32 -> vector<4x256xf32>
    %65 = vector.broadcast %20 : vector<1x256xf32> to vector<4x256xf32>
    %66 = arith.mulf %64, %65 : vector<4x256xf32>
    %c240_i32_21 = arith.constant 240 : i32
    %67 = tpu.dynamic_rotate %61 by %c240_i32_21 dim 1 : vector<4x256xf32>, i32 -> vector<4x256xf32>
    %68 = vector.broadcast %24 : vector<1x256xf32> to vector<4x256xf32>
    %69 = arith.mulf %67, %68 : vector<4x256xf32>
    %c1_i32_22 = arith.constant 1 : i32
    %70 = tpu.dynamic_rotate %61 by %c1_i32_22 dim 1 : vector<4x256xf32>, i32 -> vector<4x256xf32>
    %71 = vector.broadcast %28 : vector<1x256xf32> to vector<4x256xf32>
    %72 = arith.mulf %70, %71 : vector<4x256xf32>
    %c255_i32_23 = arith.constant 255 : i32
    %73 = tpu.dynamic_rotate %61 by %c255_i32_23 dim 1 : vector<4x256xf32>, i32 -> vector<4x256xf32>
    %74 = vector.broadcast %32 : vector<1x256xf32> to vector<4x256xf32>
    %75 = arith.mulf %73, %74 : vector<4x256xf32>
    %76 = tpu.concatenate %66, %61, %69, %72, %75 in 0 : vector<4x256xf32>, vector<4x256xf32>, vector<4x256xf32>, vector<4x256xf32>, vector<4x256xf32> -> vector<20x256xf32>
    %cst_24 = arith.constant dense<0.000000e+00> : vector<4x256xf32>
    %77 = tpu.matmul %63, %76, %cst_24 {dimension_numbers = #tpu.dot_dimension_numbers<[1], [0], [0], [1], [0, 0, 1, 1], [], []>} : vector<4x20xf32>, vector<20x256xf32>, vector<4x256xf32> -> vector<4x256xf32>
    %c1_25 = arith.constant 1 : index
    %c0_26 = arith.constant 0 : index
    %c0_27 = arith.constant 0 : index
    %78 = vector.load %arg3[%c1_25, %c0_26, %c0_27] : memref<5x4x1xf32, #tpu.memory_space<vmem>>, vector<1x4x1xf32>
    %79 = vector.shape_cast %78 : vector<1x4x1xf32> to vector<4x1xf32>
    %80 = vector.broadcast %79 : vector<4x1xf32> to vector<4x256xf32>
    %81 = arith.addf %77, %80 : vector<4x256xf32>
    %c1_28 = arith.constant 1 : index
    %82 = memref.load %arg5[%c1_28] : memref<5xf32, #tpu.memory_space<smem>>
    %cst_29 = arith.constant 0.000000e+00 : f32
    %83 = vector.broadcast %cst_29 : f32 to vector<4x256xf32>
    %84 = arith.cmpf oge, %81, %83 : vector<4x256xf32>
    %85 = vector.broadcast %82 : f32 to vector<4x256xf32>
    %86 = arith.mulf %85, %81 : vector<4x256xf32>
    %87 = arith.select %84, %81, %86 : vector<4x256xi1>, vector<4x256xf32>
    %88 = arith.addf %87, %61 : vector<4x256xf32>
    %c2 = arith.constant 2 : index
    %c0_30 = arith.constant 0 : index
    %c0_31 = arith.constant 0 : index
    %89 = vector.load %arg2[%c2, %c0_30, %c0_31] : memref<4x4x20xf32, #tpu.memory_space<vmem>>, vector<1x4x20xf32>
    %90 = vector.shape_cast %89 : vector<1x4x20xf32> to vector<4x20xf32>
    %c16_i32_32 = arith.constant 16 : i32
    %91 = tpu.dynamic_rotate %88 by %c16_i32_32 dim 1 : vector<4x256xf32>, i32 -> vector<4x256xf32>
    %92 = vector.broadcast %20 : vector<1x256xf32> to vector<4x256xf32>
    %93 = arith.mulf %91, %92 : vector<4x256xf32>
    %c240_i32_33 = arith.constant 240 : i32
    %94 = tpu.dynamic_rotate %88 by %c240_i32_33 dim 1 : vector<4x256xf32>, i32 -> vector<4x256xf32>
    %95 = vector.broadcast %24 : vector<1x256xf32> to vector<4x256xf32>
    %96 = arith.mulf %94, %95 : vector<4x256xf32>
    %c1_i32_34 = arith.constant 1 : i32
    %97 = tpu.dynamic_rotate %88 by %c1_i32_34 dim 1 : vector<4x256xf32>, i32 -> vector<4x256xf32>
    %98 = vector.broadcast %28 : vector<1x256xf32> to vector<4x256xf32>
    %99 = arith.mulf %97, %98 : vector<4x256xf32>
    %c255_i32_35 = arith.constant 255 : i32
    %100 = tpu.dynamic_rotate %88 by %c255_i32_35 dim 1 : vector<4x256xf32>, i32 -> vector<4x256xf32>
    %101 = vector.broadcast %32 : vector<1x256xf32> to vector<4x256xf32>
    %102 = arith.mulf %100, %101 : vector<4x256xf32>
    %103 = tpu.concatenate %93, %88, %96, %99, %102 in 0 : vector<4x256xf32>, vector<4x256xf32>, vector<4x256xf32>, vector<4x256xf32>, vector<4x256xf32> -> vector<20x256xf32>
    %cst_36 = arith.constant dense<0.000000e+00> : vector<4x256xf32>
    %104 = tpu.matmul %90, %103, %cst_36 {dimension_numbers = #tpu.dot_dimension_numbers<[1], [0], [0], [1], [0, 0, 1, 1], [], []>} : vector<4x20xf32>, vector<20x256xf32>, vector<4x256xf32> -> vector<4x256xf32>
    %c2_37 = arith.constant 2 : index
    %c0_38 = arith.constant 0 : index
    %c0_39 = arith.constant 0 : index
    %105 = vector.load %arg3[%c2_37, %c0_38, %c0_39] : memref<5x4x1xf32, #tpu.memory_space<vmem>>, vector<1x4x1xf32>
    %106 = vector.shape_cast %105 : vector<1x4x1xf32> to vector<4x1xf32>
    %107 = vector.broadcast %106 : vector<4x1xf32> to vector<4x256xf32>
    %108 = arith.addf %104, %107 : vector<4x256xf32>
    %c2_40 = arith.constant 2 : index
    %109 = memref.load %arg5[%c2_40] : memref<5xf32, #tpu.memory_space<smem>>
    %cst_41 = arith.constant 0.000000e+00 : f32
    %110 = vector.broadcast %cst_41 : f32 to vector<4x256xf32>
    %111 = arith.cmpf oge, %108, %110 : vector<4x256xf32>
    %112 = vector.broadcast %109 : f32 to vector<4x256xf32>
    %113 = arith.mulf %112, %108 : vector<4x256xf32>
    %114 = arith.select %111, %108, %113 : vector<4x256xi1>, vector<4x256xf32>
    %115 = arith.addf %114, %88 : vector<4x256xf32>
    %c3 = arith.constant 3 : index
    %c0_42 = arith.constant 0 : index
    %c0_43 = arith.constant 0 : index
    %116 = vector.load %arg2[%c3, %c0_42, %c0_43] : memref<4x4x20xf32, #tpu.memory_space<vmem>>, vector<1x4x20xf32>
    %117 = vector.shape_cast %116 : vector<1x4x20xf32> to vector<4x20xf32>
    %c16_i32_44 = arith.constant 16 : i32
    %118 = tpu.dynamic_rotate %115 by %c16_i32_44 dim 1 : vector<4x256xf32>, i32 -> vector<4x256xf32>
    %119 = vector.broadcast %20 : vector<1x256xf32> to vector<4x256xf32>
    %120 = arith.mulf %118, %119 : vector<4x256xf32>
    %c240_i32_45 = arith.constant 240 : i32
    %121 = tpu.dynamic_rotate %115 by %c240_i32_45 dim 1 : vector<4x256xf32>, i32 -> vector<4x256xf32>
    %122 = vector.broadcast %24 : vector<1x256xf32> to vector<4x256xf32>
    %123 = arith.mulf %121, %122 : vector<4x256xf32>
    %c1_i32_46 = arith.constant 1 : i32
    %124 = tpu.dynamic_rotate %115 by %c1_i32_46 dim 1 : vector<4x256xf32>, i32 -> vector<4x256xf32>
    %125 = vector.broadcast %28 : vector<1x256xf32> to vector<4x256xf32>
    %126 = arith.mulf %124, %125 : vector<4x256xf32>
    %c255_i32_47 = arith.constant 255 : i32
    %127 = tpu.dynamic_rotate %115 by %c255_i32_47 dim 1 : vector<4x256xf32>, i32 -> vector<4x256xf32>
    %128 = vector.broadcast %32 : vector<1x256xf32> to vector<4x256xf32>
    %129 = arith.mulf %127, %128 : vector<4x256xf32>
    %130 = tpu.concatenate %120, %115, %123, %126, %129 in 0 : vector<4x256xf32>, vector<4x256xf32>, vector<4x256xf32>, vector<4x256xf32>, vector<4x256xf32> -> vector<20x256xf32>
    %cst_48 = arith.constant dense<0.000000e+00> : vector<4x256xf32>
    %131 = tpu.matmul %117, %130, %cst_48 {dimension_numbers = #tpu.dot_dimension_numbers<[1], [0], [0], [1], [0, 0, 1, 1], [], []>} : vector<4x20xf32>, vector<20x256xf32>, vector<4x256xf32> -> vector<4x256xf32>
    %c3_49 = arith.constant 3 : index
    %c0_50 = arith.constant 0 : index
    %c0_51 = arith.constant 0 : index
    %132 = vector.load %arg3[%c3_49, %c0_50, %c0_51] : memref<5x4x1xf32, #tpu.memory_space<vmem>>, vector<1x4x1xf32>
    %133 = vector.shape_cast %132 : vector<1x4x1xf32> to vector<4x1xf32>
    %134 = vector.broadcast %133 : vector<4x1xf32> to vector<4x256xf32>
    %135 = arith.addf %131, %134 : vector<4x256xf32>
    %c3_52 = arith.constant 3 : index
    %136 = memref.load %arg5[%c3_52] : memref<5xf32, #tpu.memory_space<smem>>
    %cst_53 = arith.constant 0.000000e+00 : f32
    %137 = vector.broadcast %cst_53 : f32 to vector<4x256xf32>
    %138 = arith.cmpf oge, %135, %137 : vector<4x256xf32>
    %139 = vector.broadcast %136 : f32 to vector<4x256xf32>
    %140 = arith.mulf %139, %135 : vector<4x256xf32>
    %141 = arith.select %138, %135, %140 : vector<4x256xi1>, vector<4x256xf32>
    %142 = arith.addf %141, %115 : vector<4x256xf32>
    %143 = tpu.concatenate %34, %61, %88, %115, %142 in 0 : vector<4x256xf32>, vector<4x256xf32>, vector<4x256xf32>, vector<4x256xf32>, vector<4x256xf32> -> vector<20x256xf32>
    %c0_54 = arith.constant 0 : index
    %c0_55 = arith.constant 0 : index
    %144 = vector.load %arg4[%c0_54, %c0_55] : memref<8x100xf32, #tpu.memory_space<vmem>>, vector<8x100xf32>
    %c16_i32_56 = arith.constant 16 : i32
    %145 = tpu.dynamic_rotate %143 by %c16_i32_56 dim 1 : vector<20x256xf32>, i32 -> vector<20x256xf32>
    %146 = vector.broadcast %20 : vector<1x256xf32> to vector<20x256xf32>
    %147 = arith.mulf %145, %146 : vector<20x256xf32>
    %c240_i32_57 = arith.constant 240 : i32
    %148 = tpu.dynamic_rotate %143 by %c240_i32_57 dim 1 : vector<20x256xf32>, i32 -> vector<20x256xf32>
    %149 = vector.broadcast %24 : vector<1x256xf32> to vector<20x256xf32>
    %150 = arith.mulf %148, %149 : vector<20x256xf32>
    %c1_i32_58 = arith.constant 1 : i32
    %151 = tpu.dynamic_rotate %143 by %c1_i32_58 dim 1 : vector<20x256xf32>, i32 -> vector<20x256xf32>
    %152 = vector.broadcast %28 : vector<1x256xf32> to vector<20x256xf32>
    %153 = arith.mulf %151, %152 : vector<20x256xf32>
    %c255_i32_59 = arith.constant 255 : i32
    %154 = tpu.dynamic_rotate %143 by %c255_i32_59 dim 1 : vector<20x256xf32>, i32 -> vector<20x256xf32>
    %155 = vector.broadcast %32 : vector<1x256xf32> to vector<20x256xf32>
    %156 = arith.mulf %154, %155 : vector<20x256xf32>
    %157 = tpu.concatenate %147, %143, %150, %153, %156 in 0 : vector<20x256xf32>, vector<20x256xf32>, vector<20x256xf32>, vector<20x256xf32>, vector<20x256xf32> -> vector<100x256xf32>
    %cst_60 = arith.constant dense<0.000000e+00> : vector<8x256xf32>
    %158 = tpu.matmul %144, %157, %cst_60 {dimension_numbers = #tpu.dot_dimension_numbers<[1], [0], [0], [1], [0, 0, 1, 1], [], []>} : vector<8x100xf32>, vector<100x256xf32>, vector<8x256xf32> -> vector<8x256xf32>
    %159 = vector.extract_strided_slice %158 {offsets = [0, 0], sizes = [4, 256], strides = [1, 1]} : vector<8x256xf32> to vector<4x256xf32>
    %c4 = arith.constant 4 : index
    %c0_61 = arith.constant 0 : index
    %c0_62 = arith.constant 0 : index
    %160 = vector.load %arg3[%c4, %c0_61, %c0_62] : memref<5x4x1xf32, #tpu.memory_space<vmem>>, vector<1x4x1xf32>
    %161 = vector.shape_cast %160 : vector<1x4x1xf32> to vector<4x1xf32>
    %162 = vector.broadcast %161 : vector<4x1xf32> to vector<4x256xf32>
    %163 = arith.addf %159, %162 : vector<4x256xf32>
    %164 = vector.extract_strided_slice %158 {offsets = [4, 0], sizes = [4, 256], strides = [1, 1]} : vector<8x256xf32> to vector<4x256xf32>
    %c4_63 = arith.constant 4 : index
    %165 = memref.load %arg5[%c4_63] : memref<5xf32, #tpu.memory_space<smem>>
    %cst_64 = arith.constant 0.000000e+00 : f32
    %166 = vector.broadcast %cst_64 : f32 to vector<4x256xf32>
    %167 = arith.cmpf oge, %163, %166 : vector<4x256xf32>
    %168 = vector.broadcast %165 : f32 to vector<4x256xf32>
    %169 = arith.mulf %168, %163 : vector<4x256xf32>
    %170 = arith.select %167, %163, %169 : vector<4x256xi1>, vector<4x256xf32>
    %171 = arith.addf %170, %164 : vector<4x256xf32>
    %c0_65 = arith.constant 0 : index
    %c0_66 = arith.constant 0 : index
    %c0_67 = arith.constant 0 : index
    %172 = vector.load %arg6[%c0_65, %c0_66, %c0_67] : memref<1x4x256xf32, #tpu.memory_space<vmem>>, vector<1x4x256xf32>
    %173 = vector.shape_cast %172 : vector<1x4x256xf32> to vector<4x256xf32>
    %174 = vector.shape_cast %171 : vector<4x256xf32> to vector<1x4x256xf32>
    tpu.vector_store %arg6[%c0_65, %c0_66, %c0_67], %174 {strides = array<i32>} : memref<1x4x256xf32, #tpu.memory_space<vmem>>, vector<1x4x256xf32>,
    return
  }
  func.func @transform_0(%arg0: i32) -> (i32, i32, i32) {
    %c0_i32 = arith.constant 0 : i32
    %c0_i32_0 = arith.constant 0 : i32
    %c0_i32_1 = arith.constant 0 : i32
    return %arg0, %c0_i32, %c0_i32_0 : i32, i32, i32
  }
  func.func @transform_1(%arg0: i32) -> (i32, i32, i32) {
    %c0_i32 = arith.constant 0 : i32
    %c0_i32_0 = arith.constant 0 : i32
    %c0_i32_1 = arith.constant 0 : i32
    %c0_i32_2 = arith.constant 0 : i32
    return %c0_i32, %c0_i32_0, %c0_i32_1 : i32, i32, i32
  }
  func.func @transform_2(%arg0: i32) -> (i32, i32, i32) {
    %c0_i32 = arith.constant 0 : i32
    %c0_i32_0 = arith.constant 0 : i32
    %c0_i32_1 = arith.constant 0 : i32
    %c0_i32_2 = arith.constant 0 : i32
    return %c0_i32, %c0_i32_0, %c0_i32_1 : i32, i32, i32
  }
  func.func @transform_3(%arg0: i32) -> (i32, i32) {
    %c0_i32 = arith.constant 0 : i32
    %c0_i32_0 = arith.constant 0 : i32
    %c0_i32_1 = arith.constant 0 : i32
    return %c0_i32, %c0_i32_0 : i32, i32
  }
  func.func @transform_4(%arg0: i32) -> i32 {
    %c0_i32 = arith.constant 0 : i32
    %c0_i32_0 = arith.constant 0 : i32
    return %c0_i32 : i32
  }
  func.func @transform_5(%arg0: i32) -> (i32, i32, i32) {
    %c0_i32 = arith.constant 0 : i32
    %c0_i32_0 = arith.constant 0 : i32
    %c0_i32_1 = arith.constant 0 : i32
    return %arg0, %c0_i32, %c0_i32_0 : i32, i32, i32
  }
}

</mosaic_0001>

<llo_original>
// kernel: dconvolution.1
$region0: #{dconvolution.1}
  #allocation0 [shape = 'u32[]', space=smem, size = 0x4, offset = 0x4, fixed_abs, tag = 'smem constant byte address 0x4 - core index']
  #allocation1 [shape = 'u32[72,128]{1,0:T(1,128)}', space=vmem, size = 0x9000, scoped, tag = 'internal scratch']
  %s0 = inlined_call_operand.vmem [shape: f32[2,4,256], index: 0, kind: input, shape index: {}]
  %s1 = inlined_call_operand.vmem [shape: f32[4,4,20], index: 1, kind: input, shape index: {}]
  %s2 = inlined_call_operand.vmem [shape: f32[5,4,1], index: 2, kind: input, shape index: {}]
  %s3 = inlined_call_operand.vmem [shape: f32[8,100], index: 3, kind: input, shape index: {}]
  %s4 = inlined_call_operand.vmem [shape: f32[5], index: 4, kind: input, shape index: {}]
  %s5 = inlined_call_operand.vmem [shape: f32[2,4,256], index: 5, kind: output, shape index: {}]
  %s6 = sld [smem:[#allocation0]]
  $region57: #{dconvolution.1} parent=0
    _
  %s8 = ssub.s32 1, %s6
  %s9 = scalar_select 0, %s8, %s6
  $region1: #{dconvolution.1} parent=0
    #allocation2 [shape = 'u8[512]{0}', space=smem, size = 0x200, scoped, tag = 'input window, operand 4, single buffered']
    #allocation3 [shape = 's32[2]{0}', space=sflag, size = 0x8, scoped, tag = 'scoped memory for dconvolution.1']
    %10 = vsyncpa [#allocation3], 0
    loop: start=0, step=1, limit=4
    $region2: #{dconvolution.1} parent=1 // loop_pre_header
      _
    $region3: #{dconvolution.1} parent=1 // loop_header
      %s12 = sphi 0, %s16
      %p13 = scmp.ge.s32.totalorder %s12, 4
      %s22 = sphi 0, %s24
      %s25 = sphi 0, %s22
      %s26 = sphi 0, %s25
      %s42 = sphi 0, %s26
      %s46 = sphi 0, %s46
      %s48 = sphi 0, %s46
      %s49 = sphi 0, %s48
      %s63 = sphi 0, %s49
      %s67 = sphi 0, %s67
      %s69 = sphi 0, %s67
      %s70 = sphi 0, %s69
      %s84 = sphi 0, %s70
      %s88 = sphi 0, %s88
      %s90 = sphi 0, %s88
      %s91 = sphi 0, %s90
      %s105 = sphi 0, %s91
      %s109 = sphi 0, %s109
      %s111 = sphi 0, %s109
      %s112 = sphi 0, %s111
      %s126 = sphi 0, %s112
      %s132 = sphi 0, %s134
      %s135 = sphi 0, %s132
      %s136 = sphi 0, %s135
      %s152 = sphi 0, %s136
    $region4: #{dconvolution.1} parent=1 // loop_header_branch
      %15 = sbr.rel (%p13) target = $region8
    $region5: #{dconvolution.1} parent=1 // loop_body
      %s17 = ssub.s32 %s12, 1
      %s18 = ssub.s32 %s12, 2
      %s19 = sadd.s32 %s12, 1
      %s20 = ssub.s32 %s12, %s19
      %p21 = scmp.eq.s32.totalorder %s20, 0
      %s23 = sadd.s32 %s22, 1
      %s24 = scalar_select %p21, %s22, %s23
      %p27 = pneg %p21
      %p28 = scmp.eq.s32.totalorder %s12, 1
      %p29 = por %p27, %p28
      %p30 = scmp.ne.s32.totalorder %s22, %s25
      %p31 = scmp.eq.s32.totalorder %s12, 0
      %p32 = por %p30, %p31
      %p33 = scmp.ne.s32.totalorder %s22, %s25
      %p34 = scmp.eq.s32.totalorder %s17, 1
      %p35 = por %p33, %p34
      %p36 = scmp.ne.s32.totalorder %s25, %s26
      %p37 = scmp.eq.s32.totalorder %s17, 0
      %p38 = por %p36, %p37
      %p39 = scmp.ne.s32.totalorder %s25, %s26
      %p40 = scmp.eq.s32.totalorder %s18, 1
      %p41 = por %p39, %p40
      %p43 = scmp.ne.s32.totalorder %s26, %s42
      %p44 = scmp.eq.s32.totalorder %s18, 0
      %p45 = por %p43, %p44
      %s47 = sadd.s32 %s46, 1
      %p50 = scmp.eq.s32.totalorder %s12, 1
      %p51 = scmp.ne.s32.totalorder %s46, %s48
      %p52 = scmp.eq.s32.totalorder %s12, 0
      %p53 = por %p51, %p52
      %p54 = scmp.ne.s32.totalorder %s46, %s48
      %p55 = scmp.eq.s32.totalorder %s17, 1
      %p56 = por %p54, %p55
      %p57 = scmp.ne.s32.totalorder %s48, %s49
      %p58 = scmp.eq.s32.totalorder %s17, 0
      %p59 = por %p57, %p58
      %p60 = scmp.ne.s32.totalorder %s48, %s49
      %p61 = scmp.eq.s32.totalorder %s18, 1
      %p62 = por %p60, %p61
      %p64 = scmp.ne.s32.totalorder %s49, %s63
      %p65 = scmp.eq.s32.totalorder %s18, 0
      %p66 = por %p64, %p65
      %s68 = sadd.s32 %s67, 1
      %p71 = scmp.eq.s32.totalorder %s12, 1
      %p72 = scmp.ne.s32.totalorder %s67, %s69
      %p73 = scmp.eq.s32.totalorder %s12, 0
      %p74 = por %p72, %p73
      %p75 = scmp.ne.s32.totalorder %s67, %s69
      %p76 = scmp.eq.s32.totalorder %s17, 1
      %p77 = por %p75, %p76
      %p78 = scmp.ne.s32.totalorder %s69, %s70
      %p79 = scmp.eq.s32.totalorder %s17, 0
      %p80 = por %p78, %p79
      %p81 = scmp.ne.s32.totalorder %s69, %s70
      %p82 = scmp.eq.s32.totalorder %s18, 1
      %p83 = por %p81, %p82
      %p85 = scmp.ne.s32.totalorder %s70, %s84
      %p86 = scmp.eq.s32.totalorder %s18, 0
      %p87 = por %p85, %p86
      %s89 = sadd.s32 %s88, 1
      %p92 = scmp.eq.s32.totalorder %s12, 1
      %p93 = scmp.ne.s32.totalorder %s88, %s90
      %p94 = scmp.eq.s32.totalorder %s12, 0
      %p95 = por %p93, %p94
      %p96 = scmp.ne.s32.totalorder %s88, %s90
      %p97 = scmp.eq.s32.totalorder %s17, 1
      %p98 = por %p96, %p97
      %p99 = scmp.ne.s32.totalorder %s90, %s91
      %p100 = scmp.eq.s32.totalorder %s17, 0
      %p101 = por %p99, %p100
      %p102 = scmp.ne.s32.totalorder %s90, %s91
      %p103 = scmp.eq.s32.totalorder %s18, 1
      %p104 = por %p102, %p103
      %p106 = scmp.ne.s32.totalorder %s91, %s105
      %p107 = scmp.eq.s32.totalorder %s18, 0
      %p108 = por %p106, %p107
      %s110 = sadd.s32 %s109, 1
      %p113 = scmp.eq.s32.totalorder %s12, 1
      %p114 = scmp.ne.s32.totalorder %s109, %s111
      %p115 = scmp.eq.s32.totalorder %s12, 0
      %p116 = por %p114, %p115
      %p117 = scmp.ne.s32.totalorder %s109, %s111
      %p118 = scmp.eq.s32.totalorder %s17, 1
      %p119 = por %p117, %p118
      %p120 = scmp.ne.s32.totalorder %s111, %s112
      %p121 = scmp.eq.s32.totalorder %s17, 0
      %p122 = por %p120, %p121
      %p123 = scmp.ne.s32.totalorder %s111, %s112
      %p124 = scmp.eq.s32.totalorder %s18, 1
      %p125 = por %p123, %p124
      %p127 = scmp.ne.s32.totalorder %s112, %s126
      %p128 = scmp.eq.s32.totalorder %s18, 0
      %p129 = por %p127, %p128
      %s130 = ssub.s32 %s12, %s19
      %p131 = scmp.eq.s32.totalorder %s130, 0
      %s133 = sadd.s32 %s132, 1
      %s134 = scalar_select %p131, %s132, %s133
      %p137 = pneg %p131
      %p138 = scmp.eq.s32.totalorder %s12, 1
      %p139 = por %p137, %p138
      %p140 = scmp.ne.s32.totalorder %s132, %s135
      %p141 = scmp.eq.s32.totalorder %s12, 0
      %p142 = por %p140, %p141
      %p143 = scmp.ne.s32.totalorder %s132, %s135
      %p144 = scmp.eq.s32.totalorder %s17, 1
      %p145 = por %p143, %p144
      %p146 = scmp.ne.s32.totalorder %s135, %s136
      %p147 = scmp.eq.s32.totalorder %s17, 0
      %p148 = por %p146, %p147
      %p149 = scmp.ne.s32.totalorder %s135, %s136
      %p150 = scmp.eq.s32.totalorder %s18, 1
      %p151 = por %p149, %p150
      %p153 = scmp.ne.s32.totalorder %s136, %s152
      %p154 = scmp.eq.s32.totalorder %s18, 0
      %p155 = por %p153, %p154
      %p156 = scmp.le.s32.totalorder 1, %s12
      %p157 = scmp.lt.s32.totalorder %s12, 3
      %p158 = pnand %p156, %p157
      %p159 = pneg %p158
      // Predicated region
      $region9: #{dconvolution.1} parent=5 // pred_check
        _
      $region10: #{dconvolution.1} parent=5 // pred_check_branch
        %161 = sbr.rel (%p158) target = $region12
      $region11: #{dconvolution.1} parent=5 // pred_region
        %s162 = ssub.s32 %s12, 1
        // Predicated region
        $region13: #{dconvolution.1} parent=11 // pred_check
          %p163 = pneg %p59
        $region14: #{dconvolution.1} parent=11 // pred_check_branch
          %165 = sbr.rel (%p163) target = $region16
        $region15: #{dconvolution.1} parent=11 // pred_region
          _
        $region16: #{dconvolution.1} parent=11 // pred_fallthru
          _
        // Predicated region
        $region17: #{dconvolution.1} parent=11 // pred_check
          %p166 = pneg %p80
        $region18: #{dconvolution.1} parent=11 // pred_check_branch
          %168 = sbr.rel (%p166) target = $region20
        $region19: #{dconvolution.1} parent=11 // pred_region
          _
        $region20: #{dconvolution.1} parent=11 // pred_fallthru
          _
        // Predicated region
        $region21: #{dconvolution.1} parent=11 // pred_check
          %p169 = pneg %p101
        $region22: #{dconvolution.1} parent=11 // pred_check_branch
          %171 = sbr.rel (%p169) target = $region24
        $region23: #{dconvolution.1} parent=11 // pred_region
          _
        $region24: #{dconvolution.1} parent=11 // pred_fallthru
          _
        // Predicated region
        $region25: #{dconvolution.1} parent=11 // pred_check
          %p172 = pneg %p122
        $region26: #{dconvolution.1} parent=11 // pred_check_branch
          %174 = sbr.rel (%p172) target = $region28
        $region27: #{dconvolution.1} parent=11 // pred_region
          %176 = vsyncadd [#allocation3], 0
          %s178 = sshll.u32 %s4, 4
          %s179 = int_to_ptr.vmem [resolvable:$true] %s178
          %181 = dma.vmem_to_smem %s179, 16, [#allocation2], [#allocation3]
        $region28: #{dconvolution.1} parent=11 // pred_fallthru
          _
      $region12: #{dconvolution.1} parent=5 // pred_fallthru
        _
      %p182 = scmp.lt.s32.totalorder %s12, 2
      // Predicated region
      $region29: #{dconvolution.1} parent=5 // pred_check
        %p183 = pneg %p182
      $region30: #{dconvolution.1} parent=5 // pred_check_branch
        %185 = sbr.rel (%p183) target = $region32
      $region31: #{dconvolution.1} parent=5 // pred_region
        // Predicated region
        $region33: #{dconvolution.1} parent=31 // pred_check
          %p186 = pneg %p32
        $region34: #{dconvolution.1} parent=31 // pred_check_branch
          %188 = sbr.rel (%p186) target = $region36
        $region35: #{dconvolution.1} parent=31 // pred_region
          %p189 = scmp.lt.s32.totalorder %s12, 1
          %s190 = scalar_select %p189, %s12, 1
          %s191 = smul.addr %s190, 2
          %s192 = smul.addr %s191, 4
          %s193 = scalar_lea.vmem %s0, %s192
        $region36: #{dconvolution.1} parent=31 // pred_fallthru
          _
      $region32: #{dconvolution.1} parent=5 // pred_fallthru
        _
      %p194 = scmp.le.s32.totalorder 1, %s12
      %p195 = scmp.lt.s32.totalorder %s12, 3
      %p196 = pnand %p194, %p195
      %p197 = pneg %p196
      // Predicated region
      $region37: #{dconvolution.1} parent=5 // pred_check
        _
      $region38: #{dconvolution.1} parent=5 // pred_check_branch
        %199 = sbr.rel (%p196) target = $region40
      $region39: #{dconvolution.1} parent=5 // pred_region
        %s200 = ssub.s32 %s12, 1
        // Predicated region
        $region41: #{dconvolution.1} parent=39 // pred_check
          %p201 = pneg %p122
        $region42: #{dconvolution.1} parent=39 // pred_check_branch
          %203 = sbr.rel (%p201) target = $region44
        $region43: #{dconvolution.1} parent=39 // pred_region
          %205 = dma.done [#allocation3], 16
        $region44: #{dconvolution.1} parent=39 // pred_fallthru
          _
        %206 = sfence
        %p207 = scmp.lt.s32.totalorder %s17, 1
        %s208 = scalar_select %p207, %s17, 1
        %s209 = smul.addr %s208, 2
        %s210 = smul.addr %s209, 4
        %s211 = scalar_lea.vmem %s0, %s210
        %p212 = pneg %p38
        %p213 = pneg %p35
        %p214 = pneg %p59
        %p215 = pneg %p56
        %p216 = pneg %p80
        %p217 = pneg %p77
        %p218 = pneg %p101
        %p219 = pneg %p98
        %p220 = pneg %p122
        %p221 = pneg %p119
        %p222 = pneg %p148
        %p223 = pneg %p145
        %p224 = scmp.lt.s32.totalorder %s17, 1
        %s225 = scalar_select %p224, %s17, 1
        %s226 = smul.addr %s225, 2
        %s227 = smul.addr %s226, 4
        %s228 = scalar_lea.vmem %s5, %s227
        %p229 = scmp.lt.s32.totalorder %s17, 1
        %s230 = scalar_select %p229, %s17, 1
        %s231 = smul.addr %s230, 2
        %s232 = smul.addr %s231, 4
        %s233 = scalar_lea.vmem %s0, %s232
        %p234 = scmp.lt.s32.totalorder %s17, 1
        %s235 = scalar_select %p234, %s17, 1
        %s236 = smul.addr %s235, 2
        %s237 = smul.addr %s236, 4
        %s238 = scalar_lea.vmem %s5, %s237
        %v239 = vlaneseq
        %v240 = vand.u32 %v239, 127
        %v241 = vadd.s32 %v240, 128
        %vm242 = vcmp.lt.s32.totalorder %v240, 0
        %v243 = vsub.s32 0, %v240
        %v244 = vsel %vm242, %v243, %v240
        %v245 = vshrl.u32 %v244, 4
        %v246 = vand.u32 %v244, 15
        %v247 = vsub.s32 0, %v246
        %v248 = vsel %vm242, %v247, %v246
        %vm249 = vcmp.lt.s32.totalorder %v241, 0
        %v250 = vsub.s32 0, %v241
        %v251 = vsel %vm249, %v250, %v241
        %v252 = vshrl.u32 %v251, 4
        %v253 = vand.u32 %v251, 15
        %v254 = vsub.s32 0, %v253
        %v255 = vsel %vm249, %v254, %v253
        %vm256 = vcmp.ne.s32.totalorder %v248, 0
        %vm257 = vcmp.ne.s32.totalorder %v255, 0
        %vm258 = vcmp.lt.s32.totalorder %v248, 0
        %vm259 = vcmp.lt.s32.totalorder %v255, 0
        %vm260 = vmand %vm258, %vm256
        %vm261 = vmand %vm259, %vm257
        %v262 = vadd.s32 %v248, 16
        %v263 = vadd.s32 %v255, 16
        %v264 = vsel %vm260, %v262, %v248
        %v265 = vsel %vm261, %v263, %v255
        %vm266 = vcmp.ge.s32.totalorder %v240, 16
        %vm267 = vcmp.ge.s32.totalorder %v241, 16
        %v268 = vsel %vm266, 1, 0
        %v269 = vsel %vm267, 1, 0
        %v270 = vcvt.s32.f32 %v268
        %v271 = vcvt.s32.f32 %v269
        %vm272 = vcmp.lt.s32.totalorder %v240, 240
        %vm273 = vcmp.lt.s32.totalorder %v241, 240
        %v274 = vsel %vm272, 1, 0
        %v275 = vsel %vm273, 1, 0
        %v276 = vcvt.s32.f32 %v274
        %v277 = vcvt.s32.f32 %v275
        %vm278 = vcmp.gt.s32.totalorder %v264, 0
        %vm279 = vcmp.gt.s32.totalorder %v265, 0
        %v280 = vsel %vm278, 1, 0
        %v281 = vsel %vm279, 1, 0
        %v282 = vcvt.s32.f32 %v280
        %v283 = vcvt.s32.f32 %v281
        %vm284 = vcmp.lt.s32.totalorder %v264, 15
        %vm285 = vcmp.lt.s32.totalorder %v265, 15
        %v286 = vsel %vm284, 1, 0
        %v287 = vsel %vm285, 1, 0
        %v288 = vcvt.s32.f32 %v286
        %v289 = vcvt.s32.f32 %v287
        %v290 = vld [vmem:[%s233] sm:$0xff]
        %v291 = vld [vmem:[%s1] sm:$0xf]
        %293 = vst [vmem:[#allocation1] ss:$2 sm:$0xff] %v290
        %v294 = vld.sshfl [vmem:[#allocation1] sm:$0xff pattern:$0x75316420]
        %v295 = vld.sshfl [vmem:[#allocation1 + $0x8] sm:$0xff pattern:$0x75316420]
        %298 = vrot.lane.b32.xlu0 %v294, 16
        %v299 = vpop.permute.xlu0 %298
        %300 = vrot.lane.b32.xlu0 %v295, 16
        %v301 = vpop.permute.xlu0 %300
        %vm302 = vcmp.lt.s32.totalorder %v240, 16
        %v303 = vsel %vm302, %v299, %v301
        %v304 = vsel %vm302, %v301, %v299
        %v305 = vmul.f32 %v304, %v270
        %v306 = vmul.f32 %v303, %v271
        %307 = vst [vmem:[#allocation1] ss:$2 sm:$0xff] %v290
        %v308 = vld.sshfl [vmem:[#allocation1] sm:$0xff pattern:$0x75316420]
        %v309 = vld.sshfl [vmem:[#allocation1 + $0x8] sm:$0xff pattern:$0x75316420]
        %312 = vrot.lane.b32.xlu0 %v308, 112
        %v313 = vpop.permute.xlu0 %312
        %314 = vrot.lane.b32.xlu0 %v309, 112
        %v315 = vpop.permute.xlu0 %314
        %vm316 = vcmp.lt.s32.totalorder %v240, 112
        %v317 = vsel %vm316, %v313, %v315
        %v318 = vsel %vm316, %v315, %v313
        %v319 = vmul.f32 %v317, %v276
        %v320 = vmul.f32 %v318, %v277
        %321 = vst [vmem:[#allocation1] ss:$2 sm:$0xff] %v290
        %v322 = vld.sshfl [vmem:[#allocation1] sm:$0xff pattern:$0x75316420]
        %v323 = vld.sshfl [vmem:[#allocation1 + $0x8] sm:$0xff pattern:$0x75316420]
        %326 = vrot.lane.b32.xlu0 %v322, 1
        %v327 = vpop.permute.xlu0 %326
        %328 = vrot.lane.b32.xlu0 %v323, 1
        %v329 = vpop.permute.xlu0 %328
        %vm330 = vcmp.lt.s32.totalorder %v240, 1
        %v331 = vsel %vm330, %v327, %v329
        %v332 = vsel %vm330, %v329, %v327
        %v333 = vmul.f32 %v332, %v282
        %v334 = vmul.f32 %v331, %v283
        %335 = vst [vmem:[#allocation1] ss:$2 sm:$0xff] %v290
        %v336 = vld.sshfl [vmem:[#allocation1] sm:$0xff pattern:$0x75316420]
        %v337 = vld.sshfl [vmem:[#allocation1 + $0x8] sm:$0xff pattern:$0x75316420]
        %340 = vrot.lane.b32.xlu0 %v336, 127
        %v341 = vpop.permute.xlu0 %340
        %342 = vrot.lane.b32.xlu0 %v337, 127
        %v343 = vpop.permute.xlu0 %342
        %vm344 = vcmp.lt.s32.totalorder %v240, 127
        %v345 = vsel %vm344, %v341, %v343
        %v346 = vsel %vm344, %v343, %v341
        %v347 = vmul.f32 %v345, %v288
        %v348 = vmul.f32 %v346, %v289
        %s349 = scalar_lea.vmem [#allocation1], 1
        %350 = vst [vmem:[%s349] ss:$2 sm:$0xff] %v290
        %v351 = vld.sshfl [vmem:[#allocation1] sm:$0xff pattern:$0x75316420]
        %v352 = vld.sshfl [vmem:[#allocation1 + $0x8] sm:$0xff pattern:$0x75316420]
        %v357 = vrot.slane %v333, 4
        %v358 = vrot.slane %v334, 4
        %vm361 = vcmask 1043456
        %v362 = vsel %vm361, %v305, %v351
        %v363 = vsel %vm361, %v306, %v352
        %v364 = vsel %vm361, %v319, %v357
        %v365 = vsel %vm361, %v320, %v358
        %v366 = vld [vmem:[%s2] sm:$0xf]
        %368 = vset.pattern.permute.xlu0 0
        %369 = vperm.xlu0 %368, %v366
        %v370 = vpop.permute.xlu0 %369
        %vm372 = vcmask 162816
        %v374 = vsel %vm372, %v291, 0
        %v377 = vsel %vm361, %v347, 0
        %v380 = vsel %vm361, %v348, 0
        %382 = vmatpush.msra.mxu0 0.0
        %383 = vmatpush.msra.mxu0 0.0
        %384 = vmatpush.msra.mxu0 0.0
        %385 = vmatpush.msra.mxu0 0.0
        %386 = vmatpush.msra.mxu0 0.0
        %387 = vmatpush.msra.mxu0 0.0
        %388 = vmatpush.msra.mxu0 0.0
        %389 = vmatpush.msra.mxu0 0.0
        %390 = vmatpush.msra.mxu0 0.0
        %391 = vmatpush.msra.mxu0 0.0
        %392 = vmatpush.msra.mxu0 0.0
        %393 = vmatpush.msra.mxu0 0.0
        %394 = vmatpush.msra.mxu0 0.0
        %395 = vmatpush.msra.mxu0 %v377
        %396 = vmatpush.msra.mxu0 %v364
        %397 = vmatpush.msra.mxu0 %v362
        %398 = vmatmul.f32.gmra.mxu0 %v374
        %v399 = vpop.f32.mrf.mxu0
        %v400 = vadd.f32 %v370, %v399
        %401 = vdwg.mxu0
        %402 = vmatpush.msra.mxu0 0.0
        %403 = vmatpush.msra.mxu0 0.0
        %404 = vmatpush.msra.mxu0 0.0
        %405 = vmatpush.msra.mxu0 0.0
        %406 = vmatpush.msra.mxu0 0.0
        %407 = vmatpush.msra.mxu0 0.0
        %408 = vmatpush.msra.mxu0 0.0
        %409 = vmatpush.msra.mxu0 0.0
        %410 = vmatpush.msra.mxu0 0.0
        %411 = vmatpush.msra.mxu0 0.0
        %412 = vmatpush.msra.mxu0 0.0
        %413 = vmatpush.msra.mxu0 0.0
        %414 = vmatpush.msra.mxu0 0.0
        %415 = vmatpush.msra.mxu0 %v380
        %416 = vmatpush.msra.mxu0 %v365
        %417 = vmatpush.msra.mxu0 %v363
        %418 = vmatmul.f32.gmra.mxu0 %v374
        %v419 = vpop.f32.mrf.mxu0
        %v420 = vadd.f32 %v370, %v419
        %421 = vdwg.mxu0
        %s422 = sld [smem:[#allocation2]]
        %vm423 = vcmp.ge.f32.partialorder %v400, 0.0
        %vm424 = vcmp.ge.f32.partialorder %v420, 0.0
        %v425 = vstv %s422
        %v426 = vmul.f32 %v425, %v400
        %v427 = vmul.f32 %v425, %v420
        %v428 = vsel %vm423, %v400, %v426
        %v429 = vsel %vm424, %v420, %v427
        %430 = vst [vmem:[#allocation1] ss:$2 sm:$0xff] %v290
        %v431 = vld.sshfl [vmem:[#allocation1] sm:$0xff pattern:$0x75316420]
        %v432 = vld.sshfl [vmem:[#allocation1 + $0x8] sm:$0xff pattern:$0x75316420]
        %v435 = vadd.f32 %v428, %v431
        %v436 = vadd.f32 %v429, %v432
        %s437 = scalar_lea.vmem %s1, 4
        %v438 = vld [vmem:[%s437] sm:$0xf]
        %439 = vrot.lane.b32.xlu0 %v435, 16
        %v440 = vpop.permute.xlu0 %439
        %441 = vrot.lane.b32.xlu0 %v436, 16
        %v442 = vpop.permute.xlu0 %441
        %v443 = vsel %vm302, %v440, %v442
        %v444 = vsel %vm302, %v442, %v440
        %v445 = vmul.f32 %v444, %v270
        %v446 = vmul.f32 %v443, %v271
        %447 = vrot.lane.b32.xlu0 %v435, 112
        %v448 = vpop.permute.xlu0 %447
        %449 = vrot.lane.b32.xlu0 %v436, 112
        %v450 = vpop.permute.xlu0 %449
        %v451 = vsel %vm316, %v448, %v450
        %v452 = vsel %vm316, %v450, %v448
        %v453 = vmul.f32 %v451, %v276
        %v454 = vmul.f32 %v452, %v277
        %455 = vrot.lane.b32.xlu0 %v435, 1
        %v456 = vpop.permute.xlu0 %455
        %457 = vrot.lane.b32.xlu0 %v436, 1
        %v458 = vpop.permute.xlu0 %457
        %v459 = vsel %vm330, %v456, %v458
        %v460 = vsel %vm330, %v458, %v456
        %v461 = vmul.f32 %v460, %v282
        %v462 = vmul.f32 %v459, %v283
        %463 = vrot.lane.b32.xlu0 %v435, 127
        %v464 = vpop.permute.xlu0 %463
        %465 = vrot.lane.b32.xlu0 %v436, 127
        %v466 = vpop.permute.xlu0 %465
        %v467 = vsel %vm344, %v464, %v466
        %v468 = vsel %vm344, %v466, %v464
        %v469 = vmul.f32 %v467, %v288
        %v470 = vmul.f32 %v468, %v289
        %v473 = vrot.slane %v435, 4
        %v474 = vrot.slane %v436, 4
        %v479 = vrot.slane %v461, 4
        %v480 = vrot.slane %v462, 4
        %v483 = vsel %vm361, %v445, %v473
        %v484 = vsel %vm361, %v446, %v474
        %v485 = vsel %vm361, %v453, %v479
        %v486 = vsel %vm361, %v454, %v480
        %s487 = scalar_lea.vmem %s2, 4
        %v488 = vld [vmem:[%s487] sm:$0xf]
        %490 = vset.pattern.permute.xlu0 0
        %491 = vperm.xlu0 %490, %v488
        %v492 = vpop.permute.xlu0 %491
        %v495 = vsel %vm372, %v438, 0
        %v498 = vsel %vm361, %v469, 0
        %v501 = vsel %vm361, %v470, 0
        %503 = vmatpush.msra.mxu0 0.0
        %504 = vmatpush.msra.mxu0 0.0
        %505 = vmatpush.msra.mxu0 0.0
        %506 = vmatpush.msra.mxu0 0.0
        %507 = vmatpush.msra.mxu0 0.0
        %508 = vmatpush.msra.mxu0 0.0
        %509 = vmatpush.msra.mxu0 0.0
        %510 = vmatpush.msra.mxu0 0.0
        %511 = vmatpush.msra.mxu0 0.0
        %512 = vmatpush.msra.mxu0 0.0
        %513 = vmatpush.msra.mxu0 0.0
        %514 = vmatpush.msra.mxu0 0.0
        %515 = vmatpush.msra.mxu0 0.0
        %516 = vmatpush.msra.mxu0 %v498
        %517 = vmatpush.msra.mxu0 %v485
        %518 = vmatpush.msra.mxu0 %v483
        %519 = vmatmul.f32.gmra.mxu0 %v495
        %v520 = vpop.f32.mrf.mxu0
        %v521 = vadd.f32 %v492, %v520
        %522 = vdwg.mxu0
        %523 = vmatpush.msra.mxu0 0.0
        %524 = vmatpush.msra.mxu0 0.0
        %525 = vmatpush.msra.mxu0 0.0
        %526 = vmatpush.msra.mxu0 0.0
        %527 = vmatpush.msra.mxu0 0.0
        %528 = vmatpush.msra.mxu0 0.0
        %529 = vmatpush.msra.mxu0 0.0
        %530 = vmatpush.msra.mxu0 0.0
        %531 = vmatpush.msra.mxu0 0.0
        %532 = vmatpush.msra.mxu0 0.0
        %533 = vmatpush.msra.mxu0 0.0
        %534 = vmatpush.msra.mxu0 0.0
        %535 = vmatpush.msra.mxu0 0.0
        %536 = vmatpush.msra.mxu0 %v501
        %537 = vmatpush.msra.mxu0 %v486
        %538 = vmatpush.msra.mxu0 %v484
        %539 = vmatmul.f32.gmra.mxu0 %v495
        %v540 = vpop.f32.mrf.mxu0
        %v541 = vadd.f32 %v492, %v540
        %542 = vdwg.mxu0
        %s543 = sld [smem:[#allocation2 + $0x1]]
        %vm544 = vcmp.ge.f32.partialorder %v521, 0.0
        %vm545 = vcmp.ge.f32.partialorder %v541, 0.0
        %v546 = vstv %s543
        %v547 = vmul.f32 %v546, %v521
        %v548 = vmul.f32 %v546, %v541
        %v549 = vsel %vm544, %v521, %v547
        %v550 = vsel %vm545, %v541, %v548
        %v551 = vadd.f32 %v549, %v435
        %v552 = vadd.f32 %v550, %v436
        %s553 = scalar_lea.vmem %s1, 8
        %v554 = vld [vmem:[%s553] sm:$0xf]
        %555 = vrot.lane.b32.xlu0 %v551, 16
        %v556 = vpop.permute.xlu0 %555
        %557 = vrot.lane.b32.xlu0 %v552, 16
        %v558 = vpop.permute.xlu0 %557
        %v559 = vsel %vm302, %v556, %v558
        %v560 = vsel %vm302, %v558, %v556
        %v561 = vmul.f32 %v560, %v270
        %v562 = vmul.f32 %v559, %v271
        %563 = vrot.lane.b32.xlu0 %v551, 112
        %v564 = vpop.permute.xlu0 %563
        %565 = vrot.lane.b32.xlu0 %v552, 112
        %v566 = vpop.permute.xlu0 %565
        %v567 = vsel %vm316, %v564, %v566
        %v568 = vsel %vm316, %v566, %v564
        %v569 = vmul.f32 %v567, %v276
        %v570 = vmul.f32 %v568, %v277
        %571 = vrot.lane.b32.xlu0 %v551, 1
        %v572 = vpop.permute.xlu0 %571
        %573 = vrot.lane.b32.xlu0 %v552, 1
        %v574 = vpop.permute.xlu0 %573
        %v575 = vsel %vm330, %v572, %v574
        %v576 = vsel %vm330, %v574, %v572
        %v577 = vmul.f32 %v576, %v282
        %v578 = vmul.f32 %v575, %v283
        %579 = vrot.lane.b32.xlu0 %v551, 127
        %v580 = vpop.permute.xlu0 %579
        %581 = vrot.lane.b32.xlu0 %v552, 127
        %v582 = vpop.permute.xlu0 %581
        %v583 = vsel %vm344, %v580, %v582
        %v584 = vsel %vm344, %v582, %v580
        %v585 = vmul.f32 %v583, %v288
        %v586 = vmul.f32 %v584, %v289
        %v589 = vrot.slane %v551, 4
        %v590 = vrot.slane %v552, 4
        %v595 = vrot.slane %v577, 4
        %v596 = vrot.slane %v578, 4
        %v599 = vsel %vm361, %v561, %v589
        %v600 = vsel %vm361, %v562, %v590
        %v601 = vsel %vm361, %v569, %v595
        %v602 = vsel %vm361, %v570, %v596
        %s603 = scalar_lea.vmem %s2, 8
        %v604 = vld [vmem:[%s603] sm:$0xf]
        %606 = vset.pattern.permute.xlu0 0
        %607 = vperm.xlu0 %606, %v604
        %v608 = vpop.permute.xlu0 %607
        %v611 = vsel %vm372, %v554, 0
        %v614 = vsel %vm361, %v585, 0
        %v617 = vsel %vm361, %v586, 0
        %619 = vmatpush.msra.mxu0 0.0
        %620 = vmatpush.msra.mxu0 0.0
        %621 = vmatpush.msra.mxu0 0.0
        %622 = vmatpush.msra.mxu0 0.0
        %623 = vmatpush.msra.mxu0 0.0
        %624 = vmatpush.msra.mxu0 0.0
        %625 = vmatpush.msra.mxu0 0.0
        %626 = vmatpush.msra.mxu0 0.0
        %627 = vmatpush.msra.mxu0 0.0
        %628 = vmatpush.msra.mxu0 0.0
        %629 = vmatpush.msra.mxu0 0.0
        %630 = vmatpush.msra.mxu0 0.0
        %631 = vmatpush.msra.mxu0 0.0
        %632 = vmatpush.msra.mxu0 %v614
        %633 = vmatpush.msra.mxu0 %v601
        %634 = vmatpush.msra.mxu0 %v599
        %635 = vmatmul.f32.gmra.mxu0 %v611
        %v636 = vpop.f32.mrf.mxu0
        %v637 = vadd.f32 %v608, %v636
        %638 = vdwg.mxu0
        %639 = vmatpush.msra.mxu0 0.0
        %640 = vmatpush.msra.mxu0 0.0
        %641 = vmatpush.msra.mxu0 0.0
        %642 = vmatpush.msra.mxu0 0.0
        %643 = vmatpush.msra.mxu0 0.0
        %644 = vmatpush.msra.mxu0 0.0
        %645 = vmatpush.msra.mxu0 0.0
        %646 = vmatpush.msra.mxu0 0.0
        %647 = vmatpush.msra.mxu0 0.0
        %648 = vmatpush.msra.mxu0 0.0
        %649 = vmatpush.msra.mxu0 0.0
        %650 = vmatpush.msra.mxu0 0.0
        %651 = vmatpush.msra.mxu0 0.0
        %652 = vmatpush.msra.mxu0 %v617
        %653 = vmatpush.msra.mxu0 %v602
        %654 = vmatpush.msra.mxu0 %v600
        %655 = vmatmul.f32.gmra.mxu0 %v611
        %v656 = vpop.f32.mrf.mxu0
        %v657 = vadd.f32 %v608, %v656
        %658 = vdwg.mxu0
        %s659 = sld [smem:[#allocation2 + $0x2]]
        %vm660 = vcmp.ge.f32.partialorder %v637, 0.0
        %vm661 = vcmp.ge.f32.partialorder %v657, 0.0
        %v662 = vstv %s659
        %v663 = vmul.f32 %v662, %v637
        %v664 = vmul.f32 %v662, %v657
        %v665 = vsel %vm660, %v637, %v663
        %v666 = vsel %vm661, %v657, %v664
        %v667 = vadd.f32 %v665, %v551
        %v668 = vadd.f32 %v666, %v552
        %s669 = scalar_lea.vmem %s1, 12
        %v670 = vld [vmem:[%s669] sm:$0xf]
        %671 = vrot.lane.b32.xlu0 %v667, 16
        %v672 = vpop.permute.xlu0 %671
        %673 = vrot.lane.b32.xlu0 %v668, 16
        %v674 = vpop.permute.xlu0 %673
        %v675 = vsel %vm302, %v672, %v674
        %v676 = vsel %vm302, %v674, %v672
        %v677 = vmul.f32 %v676, %v270
        %v678 = vmul.f32 %v675, %v271
        %679 = vrot.lane.b32.xlu0 %v667, 112
        %v680 = vpop.permute.xlu0 %679
        %681 = vrot.lane.b32.xlu0 %v668, 112
        %v682 = vpop.permute.xlu0 %681
        %v683 = vsel %vm316, %v680, %v682
        %v684 = vsel %vm316, %v682, %v680
        %v685 = vmul.f32 %v683, %v276
        %v686 = vmul.f32 %v684, %v277
        %687 = vrot.lane.b32.xlu0 %v667, 1
        %v688 = vpop.permute.xlu0 %687
        %689 = vrot.lane.b32.xlu0 %v668, 1
        %v690 = vpop.permute.xlu0 %689
        %v691 = vsel %vm330, %v688, %v690
        %v692 = vsel %vm330, %v690, %v688
        %v693 = vmul.f32 %v692, %v282
        %v694 = vmul.f32 %v691, %v283
        %695 = vrot.lane.b32.xlu0 %v667, 127
        %v696 = vpop.permute.xlu0 %695
        %697 = vrot.lane.b32.xlu0 %v668, 127
        %v698 = vpop.permute.xlu0 %697
        %v699 = vsel %vm344, %v696, %v698
        %v700 = vsel %vm344, %v698, %v696
        %v701 = vmul.f32 %v699, %v288
        %v702 = vmul.f32 %v700, %v289
        %v705 = vrot.slane %v667, 4
        %v706 = vrot.slane %v668, 4
        %v711 = vrot.slane %v693, 4
        %v712 = vrot.slane %v694, 4
        %v715 = vsel %vm361, %v677, %v705
        %v716 = vsel %vm361, %v678, %v706
        %v717 = vsel %vm361, %v685, %v711
        %v718 = vsel %vm361, %v686, %v712
        %s719 = scalar_lea.vmem %s2, 12
        %v720 = vld [vmem:[%s719] sm:$0xf]
        %722 = vset.pattern.permute.xlu0 0
        %723 = vperm.xlu0 %722, %v720
        %v724 = vpop.permute.xlu0 %723
        %v727 = vsel %vm372, %v670, 0
        %v730 = vsel %vm361, %v701, 0
        %v733 = vsel %vm361, %v702, 0
        %735 = vmatpush.msra.mxu0 0.0
        %736 = vmatpush.msra.mxu0 0.0
        %737 = vmatpush.msra.mxu0 0.0
        %738 = vmatpush.msra.mxu0 0.0
        %739 = vmatpush.msra.mxu0 0.0
        %740 = vmatpush.msra.mxu0 0.0
        %741 = vmatpush.msra.mxu0 0.0
        %742 = vmatpush.msra.mxu0 0.0
        %743 = vmatpush.msra.mxu0 0.0
        %744 = vmatpush.msra.mxu0 0.0
        %745 = vmatpush.msra.mxu0 0.0
        %746 = vmatpush.msra.mxu0 0.0
        %747 = vmatpush.msra.mxu0 0.0
        %748 = vmatpush.msra.mxu0 %v730
        %749 = vmatpush.msra.mxu0 %v717
        %750 = vmatpush.msra.mxu0 %v715
        %751 = vmatmul.f32.gmra.mxu0 %v727
        %v752 = vpop.f32.mrf.mxu0
        %v753 = vadd.f32 %v724, %v752
        %754 = vdwg.mxu0
        %755 = vmatpush.msra.mxu0 0.0
        %756 = vmatpush.msra.mxu0 0.0
        %757 = vmatpush.msra.mxu0 0.0
        %758 = vmatpush.msra.mxu0 0.0
        %759 = vmatpush.msra.mxu0 0.0
        %760 = vmatpush.msra.mxu0 0.0
        %761 = vmatpush.msra.mxu0 0.0
        %762 = vmatpush.msra.mxu0 0.0
        %763 = vmatpush.msra.mxu0 0.0
        %764 = vmatpush.msra.mxu0 0.0
        %765 = vmatpush.msra.mxu0 0.0
        %766 = vmatpush.msra.mxu0 0.0
        %767 = vmatpush.msra.mxu0 0.0
        %768 = vmatpush.msra.mxu0 %v733
        %769 = vmatpush.msra.mxu0 %v718
        %770 = vmatpush.msra.mxu0 %v716
        %771 = vmatmul.f32.gmra.mxu0 %v727
        %v772 = vpop.f32.mrf.mxu0
        %v773 = vadd.f32 %v724, %v772
        %774 = vdwg.mxu0
        %s775 = sld [smem:[#allocation2 + $0x3]]
        %vm776 = vcmp.ge.f32.partialorder %v753, 0.0
        %vm777 = vcmp.ge.f32.partialorder %v773, 0.0
        %v778 = vstv %s775
        %v779 = vmul.f32 %v778, %v753
        %v780 = vmul.f32 %v778, %v773
        %v781 = vsel %vm776, %v753, %v779
        %v782 = vsel %vm777, %v773, %v780
        %v783 = vadd.f32 %v781, %v667
        %v784 = vadd.f32 %v782, %v668
        %785 = vst [vmem:[#allocation1] ss:$2 sm:$0xff] %v290
        %v786 = vld.sshfl [vmem:[#allocation1] sm:$0xff pattern:$0x75316420]
        %v787 = vld.sshfl [vmem:[#allocation1 + $0x8] sm:$0xff pattern:$0x75316420]
        %v790 = vsel %vm361, %v786, %v473
        %v791 = vsel %vm361, %v787, %v474
        %v792 = vsel %vm361, %v551, %v705
        %v793 = vsel %vm361, %v552, %v706
        %v794 = vld [vmem:[%s3] sm:$0xff]
        %795 = vrot.lane.b32.xlu0 %v790, 16
        %v796 = vpop.permute.xlu0 %795
        %797 = vrot.lane.b32.xlu0 %v792, 16
        %v798 = vpop.permute.xlu0 %797
        %799 = vrot.lane.b32.xlu0 %v783, 16
        %v800 = vpop.permute.xlu0 %799
        %801 = vrot.lane.b32.xlu0 %v791, 16
        %v802 = vpop.permute.xlu0 %801
        %803 = vrot.lane.b32.xlu0 %v793, 16
        %v804 = vpop.permute.xlu0 %803
        %805 = vrot.lane.b32.xlu0 %v784, 16
        %v806 = vpop.permute.xlu0 %805
        %v807 = vsel %vm302, %v796, %v802
        %v808 = vsel %vm302, %v798, %v804
        %v809 = vsel %vm302, %v800, %v806
        %v810 = vsel %vm302, %v802, %v796
        %v811 = vsel %vm302, %v804, %v798
        %v812 = vsel %vm302, %v806, %v800
        %v813 = vmul.f32 %v810, %v270
        %v814 = vmul.f32 %v807, %v271
        %v815 = vmul.f32 %v811, %v270
        %v816 = vmul.f32 %v808, %v271
        %v817 = vmul.f32 %v812, %v270
        %v818 = vmul.f32 %v809, %v271
        %819 = vrot.lane.b32.xlu0 %v790, 112
        %v820 = vpop.permute.xlu0 %819
        %821 = vrot.lane.b32.xlu0 %v792, 112
        %v822 = vpop.permute.xlu0 %821
        %823 = vrot.lane.b32.xlu0 %v783, 112
        %v824 = vpop.permute.xlu0 %823
        %825 = vrot.lane.b32.xlu0 %v791, 112
        %v826 = vpop.permute.xlu0 %825
        %827 = vrot.lane.b32.xlu0 %v793, 112
        %v828 = vpop.permute.xlu0 %827
        %829 = vrot.lane.b32.xlu0 %v784, 112
        %v830 = vpop.permute.xlu0 %829
        %v831 = vsel %vm316, %v820, %v826
        %v832 = vsel %vm316, %v822, %v828
        %v833 = vsel %vm316, %v824, %v830
        %v834 = vsel %vm316, %v826, %v820
        %v835 = vsel %vm316, %v828, %v822
        %v836 = vsel %vm316, %v830, %v824
        %v837 = vmul.f32 %v831, %v276
        %v838 = vmul.f32 %v834, %v277
        %v839 = vmul.f32 %v832, %v276
        %v840 = vmul.f32 %v835, %v277
        %v841 = vmul.f32 %v833, %v276
        %v842 = vmul.f32 %v836, %v277
        %843 = vrot.lane.b32.xlu0 %v790, 1
        %v844 = vpop.permute.xlu0 %843
        %845 = vrot.lane.b32.xlu0 %v792, 1
        %v846 = vpop.permute.xlu0 %845
        %847 = vrot.lane.b32.xlu0 %v783, 1
        %v848 = vpop.permute.xlu0 %847
        %849 = vrot.lane.b32.xlu0 %v791, 1
        %v850 = vpop.permute.xlu0 %849
        %851 = vrot.lane.b32.xlu0 %v793, 1
        %v852 = vpop.permute.xlu0 %851
        %853 = vrot.lane.b32.xlu0 %v784, 1
        %v854 = vpop.permute.xlu0 %853
        %v855 = vsel %vm330, %v844, %v850
        %v856 = vsel %vm330, %v846, %v852
        %v857 = vsel %vm330, %v848, %v854
        %v858 = vsel %vm330, %v850, %v844
        %v859 = vsel %vm330, %v852, %v846
        %v860 = vsel %vm330, %v854, %v848
        %v861 = vmul.f32 %v858, %v282
        %v862 = vmul.f32 %v855, %v283
        %v863 = vmul.f32 %v859, %v282
        %v864 = vmul.f32 %v856, %v283
        %v865 = vmul.f32 %v860, %v282
        %v866 = vmul.f32 %v857, %v283
        %867 = vrot.lane.b32.xlu0 %v790, 127
        %v868 = vpop.permute.xlu0 %867
        %869 = vrot.lane.b32.xlu0 %v792, 127
        %v870 = vpop.permute.xlu0 %869
        %871 = vrot.lane.b32.xlu0 %v783, 127
        %v872 = vpop.permute.xlu0 %871
        %873 = vrot.lane.b32.xlu0 %v791, 127
        %v874 = vpop.permute.xlu0 %873
        %875 = vrot.lane.b32.xlu0 %v793, 127
        %v876 = vpop.permute.xlu0 %875
        %877 = vrot.lane.b32.xlu0 %v784, 127
        %v878 = vpop.permute.xlu0 %877
        %v879 = vsel %vm344, %v868, %v874
        %v880 = vsel %vm344, %v870, %v876
        %v881 = vsel %vm344, %v872, %v878
        %v882 = vsel %vm344, %v874, %v868
        %v883 = vsel %vm344, %v876, %v870
        %v884 = vsel %vm344, %v878, %v872
        %v885 = vmul.f32 %v879, %v288
        %v886 = vmul.f32 %v882, %v289
        %v887 = vmul.f32 %v880, %v288
        %v888 = vmul.f32 %v883, %v289
        %v889 = vmul.f32 %v881, %v288
        %v890 = vmul.f32 %v884, %v289
        %v897 = vrot.slane %v790, 4
        %v898 = vrot.slane %v791, 4
        %v899 = vrot.slane %v792, 4
        %v900 = vsel %vm361, %v897, %v899
        %v901 = vrot.slane %v793, 4
        %v902 = vsel %vm361, %v898, %v901
        %v903 = vrot.slane %v783, 4
        %v904 = vsel %vm361, %v899, %v903
        %v905 = vrot.slane %v784, 4
        %v906 = vsel %vm361, %v901, %v905
        %v919 = vrot.slane %v861, 4
        %v920 = vrot.slane %v862, 4
        %v921 = vrot.slane %v863, 4
        %v922 = vsel %vm361, %v919, %v921
        %v923 = vrot.slane %v864, 4
        %v924 = vsel %vm361, %v920, %v923
        %v925 = vrot.slane %v865, 4
        %v926 = vsel %vm361, %v921, %v925
        %v927 = vrot.slane %v866, 4
        %v928 = vsel %vm361, %v923, %v927
        %v935 = vsel %vm361, %v817, %v897
        %v936 = vsel %vm361, %v818, %v898
        %v937 = vsel %vm361, %v841, %v919
        %v938 = vsel %vm361, %v842, %v920
        %vm939 = vcmask 818176
        %v941 = vsel %vm939, %v794, 0
        %v944 = vsel %vm361, %v889, 0
        %v947 = vsel %vm361, %v890, 0
        %949 = vmatpush.msra.mxu0 0.0
        %950 = vmatpush.msra.mxu0 0.0
        %951 = vmatpush.msra.mxu0 0.0
        %952 = vmatpush.msra.mxu0 %v944
        %953 = vmatpush.msra.mxu0 %v887
        %954 = vmatpush.msra.mxu0 %v885
        %955 = vmatpush.msra.mxu0 %v926
        %956 = vmatpush.msra.mxu0 %v922
        %957 = vmatpush.msra.mxu0 %v937
        %958 = vmatpush.msra.mxu0 %v839
        %959 = vmatpush.msra.mxu0 %v837
        %960 = vmatpush.msra.mxu0 %v904
        %961 = vmatpush.msra.mxu0 %v900
        %962 = vmatpush.msra.mxu0 %v935
        %963 = vmatpush.msra.mxu0 %v815
        %964 = vmatpush.msra.mxu0 %v813
        %965 = vmatmul.f32.gmra.mxu0 %v941
        %v966 = vpop.f32.mrf.mxu0
        %v967 = vadd.f32 0.0, %v966
        %968 = vdwg.mxu0
        %969 = vmatpush.msra.mxu0 0.0
        %970 = vmatpush.msra.mxu0 0.0
        %971 = vmatpush.msra.mxu0 0.0
        %972 = vmatpush.msra.mxu0 %v947
        %973 = vmatpush.msra.mxu0 %v888
        %974 = vmatpush.msra.mxu0 %v886
        %975 = vmatpush.msra.mxu0 %v928
        %976 = vmatpush.msra.mxu0 %v924
        %977 = vmatpush.msra.mxu0 %v938
        %978 = vmatpush.msra.mxu0 %v840
        %979 = vmatpush.msra.mxu0 %v838
        %980 = vmatpush.msra.mxu0 %v906
        %981 = vmatpush.msra.mxu0 %v902
        %982 = vmatpush.msra.mxu0 %v936
        %983 = vmatpush.msra.mxu0 %v816
        %984 = vmatpush.msra.mxu0 %v814
        %985 = vmatmul.f32.gmra.mxu0 %v941
        %v986 = vpop.f32.mrf.mxu0
        %v987 = vadd.f32 0.0, %v986
        %988 = vdwg.mxu0
        %s989 = scalar_lea.vmem %s2, 16
        %v990 = vld [vmem:[%s989] sm:$0xf]
        %992 = vset.pattern.permute.xlu0 0
        %993 = vperm.xlu0 %992, %v990
        %v994 = vpop.permute.xlu0 %993
        %v996 = vadd.f32 %v967, %v994
        %v997 = vadd.f32 %v987, %v994
        %s998 = sld [smem:[#allocation2 + $0x4]]
        %vm999 = vcmp.ge.f32.partialorder %v996, 0.0
        %vm1000 = vcmp.ge.f32.partialorder %v997, 0.0
        %v1001 = vstv %s998
        %v1002 = vmul.f32 %v1001, %v996
        %v1003 = vmul.f32 %v1001, %v997
        %v1004 = vsel %vm999, %v996, %v1002
        %v1005 = vsel %vm1000, %v997, %v1003
        %v1008 = vrot.slane %v967, 4
        %v1009 = vrot.slane %v987, 4
        %v1012 = vadd.f32 %v1004, %v1008
        %v1013 = vadd.f32 %v1005, %v1009
        %v1016 = vrot.slane %v1013, 4
        %v1017 = vsel %vm361, %v1012, %v1016
        %1019 = vst [vmem:[%s238] sm:$0xff] %v1017
        %p1020 = scmp.lt.s32.totalorder %s17, 1
        %s1021 = scalar_select %p1020, %s17, 1
        %s1022 = smul.addr %s1021, 2
        %s1023 = smul.addr %s1022, 4
        %s1024 = scalar_lea.vmem %s5, %s1023
        // Predicated region
        $region45: #{dconvolution.1} parent=39 // pred_check
          %p1025 = pneg %p145
        $region46: #{dconvolution.1} parent=39 // pred_check_branch
          %1027 = sbr.rel (%p1025) target = $region48
        $region47: #{dconvolution.1} parent=39 // pred_region
          _
        $region48: #{dconvolution.1} parent=39 // pred_fallthru
          _
      $region40: #{dconvolution.1} parent=5 // pred_fallthru
        _
      %p1028 = scmp.le.s32.totalorder 2, %s12
      // Predicated region
      $region49: #{dconvolution.1} parent=5 // pred_check
        %p1029 = pneg %p1028
      $region50: #{dconvolution.1} parent=5 // pred_check_branch
        %1031 = sbr.rel (%p1029) target = $region52
      $region51: #{dconvolution.1} parent=5 // pred_region
        %s1032 = ssub.s32 %s12, 2
        // Predicated region
        $region53: #{dconvolution.1} parent=51 // pred_check
          %p1033 = pneg %p151
        $region54: #{dconvolution.1} parent=51 // pred_check_branch
          %1035 = sbr.rel (%p1033) target = $region56
        $region55: #{dconvolution.1} parent=51 // pred_region
          %p1036 = scmp.lt.s32.totalorder %s18, 1
          %s1037 = scalar_select %p1036, %s18, 1
          %s1038 = smul.addr %s1037, 2
          %s1039 = smul.addr %s1038, 4
          %s1040 = scalar_lea.vmem %s5, %s1039
        $region56: #{dconvolution.1} parent=51 // pred_fallthru
          _
      $region52: #{dconvolution.1} parent=5 // pred_fallthru
        _
    $region6: #{dconvolution.1} parent=1 // loop_footer
      %s16 = sadd.s32 1, %s12
    $region7: #{dconvolution.1} parent=1 // loop_footer_branch
      %11 = sbr.rel target = $region3
    $region8: #{dconvolution.1} parent=1 // loop_exit
      _
    %1041 = vsyncpa [#allocation3], 1
    %s1042 = scalar_lea.sflag [#allocation3], 1
    %1043 = vsyncpa %s1042, 1

</llo_original>
